<compile_context>
chip_gen: v7x
topology: tpu7x:2x2x1
jax: 0.10.0
libtpu: 0.0.40
codegen_flags: <defaults>
</compile_context>

<pallas_src>
import jax
import jax.numpy as jnp
from jax.experimental import pallas as pl
from jax.experimental.pallas import tpu as pltpu

_HIDDEN = 256
_HEAD_PAD = 128          # packed head output: [0:3]=center, [3:7]=quat, rest 0
_QUAT_LO, _QUAT_HI = 3, 7
_ROW_TILE = 512          # cap rows per grid step (VMEM guard when P scales)


def _round_up(x, m):
    return ((x + m - 1) // m) * m


# ----------------------------------------------------------------------------
# Pallas kernel: fused Linear(F,256) -> ReLU -> packed heads Linear(256,128)
#                -> exact quaternion L2 normalization on cols 3..6
# ----------------------------------------------------------------------------
def _pose_decoder_kernel(feat_ref, w1_ref, b1_ref, w2_ref, b2_ref, qmask_ref, out_ref):
    # hidden = relu(feat @ W1 + b1): bf16 MXU inputs, f32 accumulation
    h = jnp.dot(feat_ref[...], w1_ref[...], preferred_element_type=jnp.float32)
    h = jnp.maximum(h + b1_ref[...], 0.0).astype(jnp.bfloat16)

    # both heads as one lane-dense (tp, 128) MXU push against the packed slab
    y = jnp.dot(h, w2_ref[...], preferred_element_type=jnp.float32) + b2_ref[...]

    # quaternion L2 normalization on columns 3..6 only (mask is 1.0 there, else 0.0).
    # Exact 1/(1e-12 + sqrt(.)) — approx reciprocal previously broke the norm check.
    m = qmask_ref[...]                                   # (1, 128) f32
    qsq = jnp.sum(y * y * m, axis=1, keepdims=True)      # (tp, 1)
    inv = 1.0 / (1e-12 + jnp.sqrt(qsq))
    out_ref[...] = y * (m * (inv - 1.0) + 1.0)           # quat cols *= inv, others * 1


# ----------------------------------------------------------------------------
# Wrappers
# ----------------------------------------------------------------------------
@jax.jit
def pose_decoder_forward_packed(feat, packed):
    """feat: (P, F) -> packed (P, 128) slab: cols 0..2 = center, 3..6 = unit quat."""
    P, F = feat.shape
    tp = min(_ROW_TILE, _round_up(P, 16))      # multiple of 16 rows (bf16 sublane pack)
    Pp = _round_up(P, tp)
    x = feat.astype(jnp.bfloat16)
    if Pp != P:
        x = jnp.pad(x, ((0, Pp - P), (0, 0)))

    out = pl.pallas_call(
        _pose_decoder_kernel,
        out_shape=jax.ShapeDtypeStruct((Pp, _HEAD_PAD), jnp.float32),
        grid=(Pp // tp,),
        in_specs=[
            pl.BlockSpec((tp, F), lambda i: (i, 0)),              # feat rows (tiled)
            pl.BlockSpec((F, _HIDDEN), lambda i: (0, 0)),          # W1 (resident)
            pl.BlockSpec((1, _HIDDEN), lambda i: (0, 0)),          # b1 (resident)
            pl.BlockSpec((_HIDDEN, _HEAD_PAD), lambda i: (0, 0)),  # packed W2 (resident)
            pl.BlockSpec((1, _HEAD_PAD), lambda i: (0, 0)),        # packed b2 (resident)
            pl.BlockSpec((1, _HEAD_PAD), lambda i: (0, 0)),        # quat-col mask
        ],
        out_specs=pl.BlockSpec((tp, _HEAD_PAD), lambda i: (i, 0)),
        compiler_params=pltpu.CompilerParams(
            dimension_semantics=("parallel",)),   # v7x: shard row tiles across both TCs
    )(x, packed["w1"], packed["b1"], packed["w2"], packed["b2"], packed["qmask"])
    return out[:P]


@jax.jit
def pose_decoder_forward(feat, packed):
    """feat: (P, F) float32 -> (center (P,3), quat (P,4)); quat is L2-normalized."""
    out = pose_decoder_forward_packed(feat, packed)
    return out[:, 0:3], out[:, _QUAT_LO:_QUAT_HI]


# ----------------------------------------------------------------------------
# Parameters (mimic nn.Linear default init; quat bias zeroed as in the module)
# ----------------------------------------------------------------------------
def _linear_init(key, fan_in, fan_out):
    kw, kb = jax.random.split(key)
    bound = 1.0 / float(fan_in) ** 0.5
    w = jax.random.uniform(kw, (fan_in, fan_out), jnp.float32, -bound, bound)
    b = jax.random.uniform(kb, (fan_out,), jnp.float32, -bound, bound)
    return w, b


def init_pose_decoder_params(key, input_feat_len):
    k1, k2, k3 = jax.random.split(key, 3)
    w_mlp, b_mlp = _linear_init(k1, input_feat_len, _HIDDEN)
    w_c, b_c = _linear_init(k2, _HIDDEN, 3)
    w_q, _ = _linear_init(k3, _HIDDEN, 4)
    b_q = jnp.zeros((4,), jnp.float32)               # self.quat.bias.data.zero_()
    return {"mlp_w": w_mlp, "mlp_b": b_mlp,
            "center_w": w_c, "center_b": b_c,
            "quat_w": w_q, "quat_b": b_q}


def pack_pose_decoder_params(p):
    """One-time host-side transform: lane-pad & fuse both heads into a (256,128) bf16
    weight, fold the constant quat bias [1,0,0,0] into the packed f32 bias, and build
    the (1,128) quat-column mask."""
    w2 = jnp.zeros((_HIDDEN, _HEAD_PAD), jnp.float32)
    w2 = w2.at[:, 0:3].set(p["center_w"]).at[:, _QUAT_LO:_QUAT_HI].set(p["quat_w"])
    b2 = jnp.zeros((_HEAD_PAD,), jnp.float32)
    b2 = b2.at[0:3].set(p["center_b"])
    b2 = b2.at[_QUAT_LO:_QUAT_HI].set(
        p["quat_b"] + jnp.array([1.0, 0.0, 0.0, 0.0], jnp.float32))
    qmask = jnp.zeros((_HEAD_PAD,), jnp.float32).at[_QUAT_LO:_QUAT_HI].set(1.0)
    return {"w1": p["mlp_w"].astype(jnp.bfloat16),
            "b1": p["mlp_b"].reshape(1, _HIDDEN).astype(jnp.float32),
            "w2": w2.astype(jnp.bfloat16),
            "b2": b2.reshape(1, _HEAD_PAD),
            "qmask": qmask.reshape(1, _HEAD_PAD)}


# ----------------------------------------------------------------------------
# Pure-JAX f32 reference (mirrors the PyTorch forward exactly)
# ----------------------------------------------------------------------------
def pose_decoder_reference(feat, p):
    hp = jax.lax.Precision.HIGHEST
    h = jax.nn.relu(jnp.dot(feat, p["mlp_w"], precision=hp) + p["mlp_b"])
    center = jnp.dot(h, p["center_w"], precision=hp) + p["center_b"]
    quat = (jnp.dot(h, p["quat_w"], precision=hp) + p["quat_b"]
            + jnp.array([1.0, 0.0, 0.0, 0.0], jnp.float32))
    quat = quat / (1e-12 + jnp.sqrt(jnp.sum(quat * quat, axis=1, keepdims=True)))
    return center, quat


# ----------------------------------------------------------------------------
if __name__ == "__main__":
    key = jax.random.PRNGKey(0)
    P = 8                       # parts in the batch
    F = 256 * 3                 # input_feat_len used by the assembly (3x256 feature)

    kf, kp = jax.random.split(key)
    feat = jax.random.normal(kf, (P, F), jnp.float32)
    params = init_pose_decoder_params(kp, F)
    packed = pack_pose_decoder_params(params)

    center, quat = pose_decoder_forward(feat, packed)
    jax.block_until_ready((center, quat))

    # shape / sanity checks
    assert center.shape == (P, 3) and quat.shape == (P, 4)
    assert bool(jnp.all(jnp.isfinite(center))) and bool(jnp.all(jnp.isfinite(quat)))
    qnorm = jnp.sqrt(jnp.sum(quat * quat, axis=1))
    assert bool(jnp.all(jnp.abs(qnorm - 1.0) < 1e-3))

    # correctness vs. the f32 HIGHEST reference (bf16 MXU inputs, f32 accumulation)
    c_ref, q_ref = pose_decoder_reference(feat, params)
    assert bool(jnp.max(jnp.abs(center - c_ref)) < 2e-2)
    assert bool(jnp.max(jnp.abs(quat - q_ref)) < 2e-2)

    print("KERNEL_OK")
</pallas_src>

<mosaic_0001>
module attributes {stable_mosaic.version = 11 : i64} {
  func.func @_pose_decoder_kernel(%arg0: i32, %arg1: memref<16x768xbf16, #tpu.memory_space<vmem>>, %arg2: memref<768x256xbf16, #tpu.memory_space<vmem>>, %arg3: memref<1x256xf32, #tpu.memory_space<vmem>>, %arg4: memref<256x128xbf16, #tpu.memory_space<vmem>>, %arg5: memref<1x128xf32, #tpu.memory_space<vmem>>, %arg6: memref<1x128xf32, #tpu.memory_space<vmem>>, %arg7: memref<16x128xf32, #tpu.memory_space<vmem>>) attributes {dimension_semantics = [#tpu.dimension_semantics<parallel>], iteration_bounds = array<i64: 1>, scalar_prefetch = 0 : i64, scratch_operands = 0 : i64, tpu.core_type = #tpu.core_type<tc>, window_params = [{transform_indices = @transform_0, window_bounds = array<i64: 16, 768>}, {pipeline_mode = #tpu.pipeline_mode<synchronous>, transform_indices = @transform_1, window_bounds = array<i64: 768, 256>}, {pipeline_mode = #tpu.pipeline_mode<synchronous>, transform_indices = @transform_2, window_bounds = array<i64: 1, 256>}, {pipeline_mode = #tpu.pipeline_mode<synchronous>, transform_indices = @transform_3, window_bounds = array<i64: 256, 128>}, {pipeline_mode = #tpu.pipeline_mode<synchronous>, transform_indices = @transform_4, window_bounds = array<i64: 1, 128>}, {pipeline_mode = #tpu.pipeline_mode<synchronous>, transform_indices = @transform_5, window_bounds = array<i64: 1, 128>}, {transform_indices = @transform_6, window_bounds = array<i64: 16, 128>}]} {
    %c0 = arith.constant 0 : index
    %c0_0 = arith.constant 0 : index
    %0 = vector.load %arg1[%c0, %c0_0] : memref<16x768xbf16, #tpu.memory_space<vmem>>, vector<16x768xbf16>
    %c0_1 = arith.constant 0 : index
    %c0_2 = arith.constant 0 : index
    %1 = vector.load %arg2[%c0_1, %c0_2] : memref<768x256xbf16, #tpu.memory_space<vmem>>, vector<768x256xbf16>
    %cst = arith.constant dense<0.000000e+00> : vector<16x256xf32>
    %2 = tpu.matmul %0, %1, %cst {dimension_numbers = #tpu.dot_dimension_numbers<[1], [0], [0], [1], [0, 0, 1, 1], [], []>} : vector<16x768xbf16>, vector<768x256xbf16>, vector<16x256xf32> -> vector<16x256xf32>
    %c0_3 = arith.constant 0 : index
    %c0_4 = arith.constant 0 : index
    %3 = vector.load %arg3[%c0_3, %c0_4] : memref<1x256xf32, #tpu.memory_space<vmem>>, vector<1x256xf32>
    %4 = vector.broadcast %3 : vector<1x256xf32> to vector<16x256xf32>
    %5 = arith.addf %2, %4 : vector<16x256xf32>
    %cst_5 = arith.constant 0.000000e+00 : f32
    %6 = vector.broadcast %cst_5 : f32 to vector<16x256xf32>
    %7 = arith.maximumf %5, %6 : vector<16x256xf32>
    %8 = arith.truncf %7 : vector<16x256xf32> to vector<16x256xbf16>
    %c0_6 = arith.constant 0 : index
    %c0_7 = arith.constant 0 : index
    %9 = vector.load %arg4[%c0_6, %c0_7] : memref<256x128xbf16, #tpu.memory_space<vmem>>, vector<256x128xbf16>
    %cst_8 = arith.constant dense<0.000000e+00> : vector<16x128xf32>
    %10 = tpu.matmul %8, %9, %cst_8 {dimension_numbers = #tpu.dot_dimension_numbers<[1], [0], [0], [1], [0, 0, 1, 1], [], []>} : vector<16x256xbf16>, vector<256x128xbf16>, vector<16x128xf32> -> vector<16x128xf32>
    %c0_9 = arith.constant 0 : index
    %c0_10 = arith.constant 0 : index
    %11 = vector.load %arg5[%c0_9, %c0_10] : memref<1x128xf32, #tpu.memory_space<vmem>>, vector<1x128xf32>
    %12 = vector.broadcast %11 : vector<1x128xf32> to vector<16x128xf32>
    %13 = arith.addf %10, %12 : vector<16x128xf32>
    %c0_11 = arith.constant 0 : index
    %c0_12 = arith.constant 0 : index
    %14 = vector.load %arg6[%c0_11, %c0_12] : memref<1x128xf32, #tpu.memory_space<vmem>>, vector<1x128xf32>
    %15 = arith.mulf %13, %13 : vector<16x128xf32>
    %16 = vector.broadcast %14 : vector<1x128xf32> to vector<16x128xf32>
    %17 = arith.mulf %15, %16 : vector<16x128xf32>
    %cst_13 = arith.constant dense<0.000000e+00> : vector<16xf32>
    %18 = vector.multi_reduction <add>, %17, %cst_13 [1] : vector<16x128xf32> to vector<16xf32>
    %19 = vector.shape_cast %18 : vector<16xf32> to vector<16x1xf32>
    %20 = math.sqrt %19 : vector<16x1xf32>
    %cst_14 = arith.constant 9.99999996E-13 : f32
    %21 = vector.broadcast %cst_14 : f32 to vector<16x1xf32>
    %22 = arith.addf %21, %20 : vector<16x1xf32>
    %cst_15 = arith.constant 1.000000e+00 : f32
    %23 = vector.broadcast %cst_15 : f32 to vector<16x1xf32>
    %24 = arith.divf %23, %22 : vector<16x1xf32>
    %cst_16 = arith.constant 1.000000e+00 : f32
    %25 = vector.broadcast %cst_16 : f32 to vector<16x1xf32>
    %26 = arith.subf %24, %25 : vector<16x1xf32>
    %27 = vector.broadcast %14 : vector<1x128xf32> to vector<16x128xf32>
    %28 = vector.broadcast %26 : vector<16x1xf32> to vector<16x128xf32>
    %29 = arith.mulf %27, %28 : vector<16x128xf32>
    %cst_17 = arith.constant 1.000000e+00 : f32
    %30 = vector.broadcast %cst_17 : f32 to vector<16x128xf32>
    %31 = arith.addf %29, %30 : vector<16x128xf32>
    %32 = arith.mulf %13, %31 : vector<16x128xf32>
    %c0_18 = arith.constant 0 : index
    %c0_19 = arith.constant 0 : index
    %33 = vector.load %arg7[%c0_18, %c0_19] : memref<16x128xf32, #tpu.memory_space<vmem>>, vector<16x128xf32>
    tpu.vector_store %arg7[%c0_18, %c0_19], %32 {strides = array<i32>} : memref<16x128xf32, #tpu.memory_space<vmem>>, vector<16x128xf32>,
    return
  }
  func.func @transform_0(%arg0: i32) -> (i32, i32) {
    %c0_i32 = arith.constant 0 : i32
    %c0_i32_0 = arith.constant 0 : i32
    return %arg0, %c0_i32 : i32, i32
  }
  func.func @transform_1(%arg0: i32) -> (i32, i32) {
    %c0_i32 = arith.constant 0 : i32
    %c0_i32_0 = arith.constant 0 : i32
    %c0_i32_1 = arith.constant 0 : i32
    return %c0_i32, %c0_i32_0 : i32, i32
  }
  func.func @transform_2(%arg0: i32) -> (i32, i32) {
    %c0_i32 = arith.constant 0 : i32
    %c0_i32_0 = arith.constant 0 : i32
    %c0_i32_1 = arith.constant 0 : i32
    return %c0_i32, %c0_i32_0 : i32, i32
  }
  func.func @transform_3(%arg0: i32) -> (i32, i32) {
    %c0_i32 = arith.constant 0 : i32
    %c0_i32_0 = arith.constant 0 : i32
    %c0_i32_1 = arith.constant 0 : i32
    return %c0_i32, %c0_i32_0 : i32, i32
  }
  func.func @transform_4(%arg0: i32) -> (i32, i32) {
    %c0_i32 = arith.constant 0 : i32
    %c0_i32_0 = arith.constant 0 : i32
    %c0_i32_1 = arith.constant 0 : i32
    return %c0_i32, %c0_i32_0 : i32, i32
  }
  func.func @transform_5(%arg0: i32) -> (i32, i32) {
    %c0_i32 = arith.constant 0 : i32
    %c0_i32_0 = arith.constant 0 : i32
    %c0_i32_1 = arith.constant 0 : i32
    return %c0_i32, %c0_i32_0 : i32, i32
  }
  func.func @transform_6(%arg0: i32) -> (i32, i32) {
    %c0_i32 = arith.constant 0 : i32
    %c0_i32_0 = arith.constant 0 : i32
    return %arg0, %c0_i32 : i32, i32
  }
}

</mosaic_0001>

<llo_original>
// kernel: pose_decoder_forward_packed.1
$region0: #{pose_decoder_forward_packed.1}
  #allocation0 [shape = 'u32[]', space=smem, size = 0x4, offset = 0x4, fixed_abs, tag = 'smem constant byte address 0x4 - core index']
  #allocation1 [shape = 'u32[144,128]{1,0:T(1,128)}', space=vmem, size = 0x12000, scoped, tag = 'internal scratch']
  %s0 = inlined_call_operand.vmem [shape: bf16[16,768], index: 0, kind: input, shape index: {}]
  %s1 = inlined_call_operand.hbm [shape: bf16[768,256], index: 1, kind: input, shape index: {}]
  %s2 = inlined_call_operand.vmem [shape: f32[1,256], index: 2, kind: input, shape index: {}]
  %s3 = inlined_call_operand.vmem [shape: bf16[256,128], index: 3, kind: input, shape index: {}]
  %s4 = inlined_call_operand.vmem [shape: f32[1,128], index: 4, kind: input, shape index: {}]
  %s5 = inlined_call_operand.vmem [shape: f32[1,128], index: 5, kind: input, shape index: {}]
  %s6 = inlined_call_operand.vmem [shape: f32[16,128], index: 6, kind: output, shape index: {}]
  %s7 = sld [smem:[#allocation0]]
  $region38: #{pose_decoder_forward_packed.1} parent=0
    _
  %s9 = ssub.s32 1, %s7
  %s10 = scalar_select 0, %s9, %s7
  $region1: #{pose_decoder_forward_packed.1} parent=0
    #allocation2 [shape = 'u8[393216]{0}', space=vmem, size = 0x60000, scoped, tag = 'input window, operand 1, single buffered']
    #allocation3 [shape = 's32[1]{0}', space=sflag, size = 0x4, scoped, tag = 'scoped memory for pose_decoder_forward_packed.1']
    %11 = vsyncpa [#allocation3], 0
    // Predicated region
    $region2: #{pose_decoder_forward_packed.1} parent=1 // pred_check
      _
    $region3: #{pose_decoder_forward_packed.1} parent=1 // pred_check_branch
      %13 = sbr.rel (0) target = $region5
    $region4: #{pose_decoder_forward_packed.1} parent=1 // pred_region
      _
    $region5: #{pose_decoder_forward_packed.1} parent=1 // pred_fallthru
      _
    // Predicated region
    $region6: #{pose_decoder_forward_packed.1} parent=1 // pred_check
      _
    $region7: #{pose_decoder_forward_packed.1} parent=1 // pred_check_branch
      %15 = sbr.rel (0) target = $region9
    $region8: #{pose_decoder_forward_packed.1} parent=1 // pred_region
      %s17 = ssub.s32 12288, 12288
      %18 = vsyncadd [#allocation3], %s17
      %s19 = sshll.u32 [#allocation2], 4
      %s20 = int_to_ptr.vmem [resolvable:$true] %s19
      %25 = dma.hbm_to_vmem [thread:$0]  %s1, 12288, %s20, [#allocation3], 128, 128, 8
    $region9: #{pose_decoder_forward_packed.1} parent=1 // pred_fallthru
      _
    // Predicated region
    $region10: #{pose_decoder_forward_packed.1} parent=1 // pred_check
      _
    $region11: #{pose_decoder_forward_packed.1} parent=1 // pred_check_branch
      %27 = sbr.rel (0) target = $region13
    $region12: #{pose_decoder_forward_packed.1} parent=1 // pred_region
      _
    $region13: #{pose_decoder_forward_packed.1} parent=1 // pred_fallthru
      _
    // Predicated region
    $region14: #{pose_decoder_forward_packed.1} parent=1 // pred_check
      _
    $region15: #{pose_decoder_forward_packed.1} parent=1 // pred_check_branch
      %29 = sbr.rel (0) target = $region17
    $region16: #{pose_decoder_forward_packed.1} parent=1 // pred_region
      _
    $region17: #{pose_decoder_forward_packed.1} parent=1 // pred_fallthru
      _
    // Predicated region
    $region18: #{pose_decoder_forward_packed.1} parent=1 // pred_check
      _
    $region19: #{pose_decoder_forward_packed.1} parent=1 // pred_check_branch
      %31 = sbr.rel (0) target = $region21
    $region20: #{pose_decoder_forward_packed.1} parent=1 // pred_region
      _
    $region21: #{pose_decoder_forward_packed.1} parent=1 // pred_fallthru
      _
    // Predicated region
    $region22: #{pose_decoder_forward_packed.1} parent=1 // pred_check
      _
    $region23: #{pose_decoder_forward_packed.1} parent=1 // pred_check_branch
      %33 = sbr.rel (0) target = $region25
    $region24: #{pose_decoder_forward_packed.1} parent=1 // pred_region
      _
    $region25: #{pose_decoder_forward_packed.1} parent=1 // pred_fallthru
      _
    // Predicated region
    $region26: #{pose_decoder_forward_packed.1} parent=1 // pred_check
      _
    $region27: #{pose_decoder_forward_packed.1} parent=1 // pred_check_branch
      %35 = sbr.rel (0) target = $region29
    $region28: #{pose_decoder_forward_packed.1} parent=1 // pred_region
      %36 = dma.done [#allocation3], 12288
    $region29: #{pose_decoder_forward_packed.1} parent=1 // pred_fallthru
      _
    %v38 = vld [vmem:[%s0] sm:$0xff]
    %v39 = vld [vmem:[%s0 + $0x8] sm:$0xff]
    %v40 = vld [vmem:[%s0 + $0x10] sm:$0xff]
    %v41 = vld [vmem:[%s0 + $0x18] sm:$0xff]
    %v42 = vld [vmem:[%s0 + $0x20] sm:$0xff]
    %v43 = vld [vmem:[%s0 + $0x28] sm:$0xff]
    %v44 = vld [vmem:[#allocation2] sm:$0xff]
    %v45 = vld [vmem:[#allocation2 + $0x8] sm:$0xff]
    %v46 = vld [vmem:[#allocation2 + $0x10] sm:$0xff]
    %v47 = vld [vmem:[#allocation2 + $0x18] sm:$0xff]
    %v48 = vld [vmem:[#allocation2 + $0x20] sm:$0xff]
    %v49 = vld [vmem:[#allocation2 + $0x28] sm:$0xff]
    %v50 = vld [vmem:[#allocation2 + $0x30] sm:$0xff]
    %v51 = vld [vmem:[#allocation2 + $0x38] sm:$0xff]
    %v52 = vld [vmem:[#allocation2 + $0x40] sm:$0xff]
    %v53 = vld [vmem:[#allocation2 + $0x48] sm:$0xff]
    %v54 = vld [vmem:[#allocation2 + $0x50] sm:$0xff]
    %v55 = vld [vmem:[#allocation2 + $0x58] sm:$0xff]
    %v56 = vld [vmem:[#allocation2 + $0x60] sm:$0xff]
    %v57 = vld [vmem:[#allocation2 + $0x68] sm:$0xff]
    %v58 = vld [vmem:[#allocation2 + $0x70] sm:$0xff]
    %v59 = vld [vmem:[#allocation2 + $0x78] sm:$0xff]
    %v60 = vld [vmem:[#allocation2 + $0x80] sm:$0xff]
    %v61 = vld [vmem:[#allocation2 + $0x88] sm:$0xff]
    %v62 = vld [vmem:[#allocation2 + $0x90] sm:$0xff]
    %v63 = vld [vmem:[#allocation2 + $0x98] sm:$0xff]
    %v64 = vld [vmem:[#allocation2 + $0xa0] sm:$0xff]
    %v65 = vld [vmem:[#allocation2 + $0xa8] sm:$0xff]
    %v66 = vld [vmem:[#allocation2 + $0xb0] sm:$0xff]
    %v67 = vld [vmem:[#allocation2 + $0xb8] sm:$0xff]
    %v68 = vld [vmem:[#allocation2 + $0xc0] sm:$0xff]
    %v69 = vld [vmem:[#allocation2 + $0xc8] sm:$0xff]
    %v70 = vld [vmem:[#allocation2 + $0xd0] sm:$0xff]
    %v71 = vld [vmem:[#allocation2 + $0xd8] sm:$0xff]
    %v72 = vld [vmem:[#allocation2 + $0xe0] sm:$0xff]
    %v73 = vld [vmem:[#allocation2 + $0xe8] sm:$0xff]
    %v74 = vld [vmem:[#allocation2 + $0xf0] sm:$0xff]
    %v75 = vld [vmem:[#allocation2 + $0xf8] sm:$0xff]
    %v76 = vld [vmem:[#allocation2 + $0x100] sm:$0xff]
    %v77 = vld [vmem:[#allocation2 + $0x108] sm:$0xff]
    %v78 = vld [vmem:[#allocation2 + $0x110] sm:$0xff]
    %v79 = vld [vmem:[#allocation2 + $0x118] sm:$0xff]
    %v80 = vld [vmem:[#allocation2 + $0x120] sm:$0xff]
    %v81 = vld [vmem:[#allocation2 + $0x128] sm:$0xff]
    %v82 = vld [vmem:[#allocation2 + $0x130] sm:$0xff]
    %v83 = vld [vmem:[#allocation2 + $0x138] sm:$0xff]
    %v84 = vld [vmem:[#allocation2 + $0x140] sm:$0xff]
    %v85 = vld [vmem:[#allocation2 + $0x148] sm:$0xff]
    %v86 = vld [vmem:[#allocation2 + $0x150] sm:$0xff]
    %v87 = vld [vmem:[#allocation2 + $0x158] sm:$0xff]
    %v88 = vld [vmem:[#allocation2 + $0x160] sm:$0xff]
    %v89 = vld [vmem:[#allocation2 + $0x168] sm:$0xff]
    %v90 = vld [vmem:[#allocation2 + $0x170] sm:$0xff]
    %v91 = vld [vmem:[#allocation2 + $0x178] sm:$0xff]
    %v92 = vld [vmem:[#allocation2 + $0x180] sm:$0xff]
    %v93 = vld [vmem:[#allocation2 + $0x188] sm:$0xff]
    %v94 = vld [vmem:[#allocation2 + $0x190] sm:$0xff]
    %v95 = vld [vmem:[#allocation2 + $0x198] sm:$0xff]
    %v96 = vld [vmem:[#allocation2 + $0x1a0] sm:$0xff]
    %v97 = vld [vmem:[#allocation2 + $0x1a8] sm:$0xff]
    %v98 = vld [vmem:[#allocation2 + $0x1b0] sm:$0xff]
    %v99 = vld [vmem:[#allocation2 + $0x1b8] sm:$0xff]
    %v100 = vld [vmem:[#allocation2 + $0x1c0] sm:$0xff]
    %v101 = vld [vmem:[#allocation2 + $0x1c8] sm:$0xff]
    %v102 = vld [vmem:[#allocation2 + $0x1d0] sm:$0xff]
    %v103 = vld [vmem:[#allocation2 + $0x1d8] sm:$0xff]
    %v104 = vld [vmem:[#allocation2 + $0x1e0] sm:$0xff]
    %v105 = vld [vmem:[#allocation2 + $0x1e8] sm:$0xff]
    %v106 = vld [vmem:[#allocation2 + $0x1f0] sm:$0xff]
    %v107 = vld [vmem:[#allocation2 + $0x1f8] sm:$0xff]
    %v108 = vld [vmem:[#allocation2 + $0x200] sm:$0xff]
    %v109 = vld [vmem:[#allocation2 + $0x208] sm:$0xff]
    %v110 = vld [vmem:[#allocation2 + $0x210] sm:$0xff]
    %v111 = vld [vmem:[#allocation2 + $0x218] sm:$0xff]
    %v112 = vld [vmem:[#allocation2 + $0x220] sm:$0xff]
    %v113 = vld [vmem:[#allocation2 + $0x228] sm:$0xff]
    %v114 = vld [vmem:[#allocation2 + $0x230] sm:$0xff]
    %v115 = vld [vmem:[#allocation2 + $0x238] sm:$0xff]
    %v116 = vld [vmem:[#allocation2 + $0x240] sm:$0xff]
    %v117 = vld [vmem:[#allocation2 + $0x248] sm:$0xff]
    %v118 = vld [vmem:[#allocation2 + $0x250] sm:$0xff]
    %v119 = vld [vmem:[#allocation2 + $0x258] sm:$0xff]
    %v120 = vld [vmem:[#allocation2 + $0x260] sm:$0xff]
    %v121 = vld [vmem:[#allocation2 + $0x268] sm:$0xff]
    %v122 = vld [vmem:[#allocation2 + $0x270] sm:$0xff]
    %v123 = vld [vmem:[#allocation2 + $0x278] sm:$0xff]
    %v124 = vld [vmem:[#allocation2 + $0x280] sm:$0xff]
    %v125 = vld [vmem:[#allocation2 + $0x288] sm:$0xff]
    %v126 = vld [vmem:[#allocation2 + $0x290] sm:$0xff]
    %v127 = vld [vmem:[#allocation2 + $0x298] sm:$0xff]
    %v128 = vld [vmem:[#allocation2 + $0x2a0] sm:$0xff]
    %v129 = vld [vmem:[#allocation2 + $0x2a8] sm:$0xff]
    %v130 = vld [vmem:[#allocation2 + $0x2b0] sm:$0xff]
    %v131 = vld [vmem:[#allocation2 + $0x2b8] sm:$0xff]
    %v132 = vld [vmem:[#allocation2 + $0x2c0] sm:$0xff]
    %v133 = vld [vmem:[#allocation2 + $0x2c8] sm:$0xff]
    %v134 = vld [vmem:[#allocation2 + $0x2d0] sm:$0xff]
    %v135 = vld [vmem:[#allocation2 + $0x2d8] sm:$0xff]
    %v136 = vld [vmem:[#allocation2 + $0x2e0] sm:$0xff]
    %v137 = vld [vmem:[#allocation2 + $0x2e8] sm:$0xff]
    %v138 = vld [vmem:[#allocation2 + $0x2f0] sm:$0xff]
    %v139 = vld [vmem:[#allocation2 + $0x2f8] sm:$0xff]
    %v140 = vld [vmem:[%s2] sm:$0x3]
    %v142 = vlaneseq
    %v143 = vshrl.u32 %v142, 7
    %v144 = vsub.s32 0, %v143
    %v145 = vrot.slane %v140, %v144
    %v146 = vlaneseq
    %v147 = vshrl.u32 %v146, 7
    %v148 = vsub.s32 1, %v147
    %v149 = vrot.slane %v140, %v148
    %v158 = vunpack.c.l.b16 %v38
    %v159 = vunpack.c.h.b16 %v38
    %v160 = vunpack.c.l.b16 %v39
    %v161 = vunpack.c.h.b16 %v39
    %v162 = vunpack.c.l.b16 %v40
    %v163 = vunpack.c.h.b16 %v40
    %v164 = vunpack.c.l.b16 %v41
    %v165 = vunpack.c.h.b16 %v41
    %v166 = vunpack.c.l.b16 %v42
    %v167 = vunpack.c.h.b16 %v42
    %v168 = vunpack.c.l.b16 %v43
    %v169 = vunpack.c.h.b16 %v43
    %v170 = vpack.c.b16 %v164, %v158
    %v171 = vpack.c.b16 %v165, %v159
    %v172 = vpack.c.b16 %v166, %v160
    %v173 = vpack.c.b16 %v167, %v161
    %v174 = vpack.c.b16 %v168, %v162
    %v175 = vpack.c.b16 %v169, %v163
    %v278 = vunpack.c.l.b16 %v44
    %v279 = vunpack.c.h.b16 %v44
    %v280 = vunpack.c.l.b16 %v45
    %v281 = vunpack.c.h.b16 %v45
    %v282 = vunpack.c.l.b16 %v46
    %v283 = vunpack.c.h.b16 %v46
    %v284 = vunpack.c.l.b16 %v47
    %v285 = vunpack.c.h.b16 %v47
    %v286 = vunpack.c.l.b16 %v48
    %v287 = vunpack.c.h.b16 %v48
    %v288 = vunpack.c.l.b16 %v49
    %v289 = vunpack.c.h.b16 %v49
    %v290 = vunpack.c.l.b16 %v50
    %v291 = vunpack.c.h.b16 %v50
    %v292 = vunpack.c.l.b16 %v51
    %v293 = vunpack.c.h.b16 %v51
    %v294 = vunpack.c.l.b16 %v52
    %v295 = vunpack.c.h.b16 %v52
    %v296 = vunpack.c.l.b16 %v53
    %v297 = vunpack.c.h.b16 %v53
    %v298 = vunpack.c.l.b16 %v54
    %v299 = vunpack.c.h.b16 %v54
    %v300 = vunpack.c.l.b16 %v55
    %v301 = vunpack.c.h.b16 %v55
    %v302 = vunpack.c.l.b16 %v56
    %v303 = vunpack.c.h.b16 %v56
    %v304 = vunpack.c.l.b16 %v57
    %v305 = vunpack.c.h.b16 %v57
    %v306 = vunpack.c.l.b16 %v58
    %v307 = vunpack.c.h.b16 %v58
    %v308 = vunpack.c.l.b16 %v59
    %v309 = vunpack.c.h.b16 %v59
    %v310 = vunpack.c.l.b16 %v60
    %v311 = vunpack.c.h.b16 %v60
    %v312 = vunpack.c.l.b16 %v61
    %v313 = vunpack.c.h.b16 %v61
    %v314 = vunpack.c.l.b16 %v62
    %v315 = vunpack.c.h.b16 %v62
    %v316 = vunpack.c.l.b16 %v63
    %v317 = vunpack.c.h.b16 %v63
    %v318 = vunpack.c.l.b16 %v64
    %v319 = vunpack.c.h.b16 %v64
    %v320 = vunpack.c.l.b16 %v65
    %v321 = vunpack.c.h.b16 %v65
    %v322 = vunpack.c.l.b16 %v66
    %v323 = vunpack.c.h.b16 %v66
    %v324 = vunpack.c.l.b16 %v67
    %v325 = vunpack.c.h.b16 %v67
    %v326 = vunpack.c.l.b16 %v68
    %v327 = vunpack.c.h.b16 %v68
    %v328 = vunpack.c.l.b16 %v69
    %v329 = vunpack.c.h.b16 %v69
    %v330 = vunpack.c.l.b16 %v70
    %v331 = vunpack.c.h.b16 %v70
    %v332 = vunpack.c.l.b16 %v71
    %v333 = vunpack.c.h.b16 %v71
    %v334 = vunpack.c.l.b16 %v72
    %v335 = vunpack.c.h.b16 %v72
    %v336 = vunpack.c.l.b16 %v73
    %v337 = vunpack.c.h.b16 %v73
    %v338 = vunpack.c.l.b16 %v74
    %v339 = vunpack.c.h.b16 %v74
    %v340 = vunpack.c.l.b16 %v75
    %v341 = vunpack.c.h.b16 %v75
    %v342 = vunpack.c.l.b16 %v76
    %v343 = vunpack.c.h.b16 %v76
    %v344 = vunpack.c.l.b16 %v77
    %v345 = vunpack.c.h.b16 %v77
    %v346 = vunpack.c.l.b16 %v78
    %v347 = vunpack.c.h.b16 %v78
    %v348 = vunpack.c.l.b16 %v79
    %v349 = vunpack.c.h.b16 %v79
    %v350 = vunpack.c.l.b16 %v80
    %v351 = vunpack.c.h.b16 %v80
    %v352 = vunpack.c.l.b16 %v81
    %v353 = vunpack.c.h.b16 %v81
    %v354 = vunpack.c.l.b16 %v82
    %v355 = vunpack.c.h.b16 %v82
    %v356 = vunpack.c.l.b16 %v83
    %v357 = vunpack.c.h.b16 %v83
    %v358 = vunpack.c.l.b16 %v84
    %v359 = vunpack.c.h.b16 %v84
    %v360 = vunpack.c.l.b16 %v85
    %v361 = vunpack.c.h.b16 %v85
    %v362 = vunpack.c.l.b16 %v86
    %v363 = vunpack.c.h.b16 %v86
    %v364 = vunpack.c.l.b16 %v87
    %v365 = vunpack.c.h.b16 %v87
    %v366 = vunpack.c.l.b16 %v88
    %v367 = vunpack.c.h.b16 %v88
    %v368 = vunpack.c.l.b16 %v89
    %v369 = vunpack.c.h.b16 %v89
    %v370 = vunpack.c.l.b16 %v90
    %v371 = vunpack.c.h.b16 %v90
    %v372 = vunpack.c.l.b16 %v91
    %v373 = vunpack.c.h.b16 %v91
    %v374 = vunpack.c.l.b16 %v92
    %v375 = vunpack.c.h.b16 %v92
    %v376 = vunpack.c.l.b16 %v93
    %v377 = vunpack.c.h.b16 %v93
    %v378 = vunpack.c.l.b16 %v94
    %v379 = vunpack.c.h.b16 %v94
    %v380 = vunpack.c.l.b16 %v95
    %v381 = vunpack.c.h.b16 %v95
    %v382 = vunpack.c.l.b16 %v96
    %v383 = vunpack.c.h.b16 %v96
    %v384 = vunpack.c.l.b16 %v97
    %v385 = vunpack.c.h.b16 %v97
    %v386 = vunpack.c.l.b16 %v98
    %v387 = vunpack.c.h.b16 %v98
    %v388 = vunpack.c.l.b16 %v99
    %v389 = vunpack.c.h.b16 %v99
    %v390 = vunpack.c.l.b16 %v100
    %v391 = vunpack.c.h.b16 %v100
    %v392 = vunpack.c.l.b16 %v101
    %v393 = vunpack.c.h.b16 %v101
    %v394 = vunpack.c.l.b16 %v102
    %v395 = vunpack.c.h.b16 %v102
    %v396 = vunpack.c.l.b16 %v103
    %v397 = vunpack.c.h.b16 %v103
    %v398 = vunpack.c.l.b16 %v104
    %v399 = vunpack.c.h.b16 %v104
    %v400 = vunpack.c.l.b16 %v105
    %v401 = vunpack.c.h.b16 %v105
    %v402 = vunpack.c.l.b16 %v106
    %v403 = vunpack.c.h.b16 %v106
    %v404 = vunpack.c.l.b16 %v107
    %v405 = vunpack.c.h.b16 %v107
    %v406 = vunpack.c.l.b16 %v108
    %v407 = vunpack.c.h.b16 %v108
    %v408 = vunpack.c.l.b16 %v109
    %v409 = vunpack.c.h.b16 %v109
    %v410 = vunpack.c.l.b16 %v110
    %v411 = vunpack.c.h.b16 %v110
    %v412 = vunpack.c.l.b16 %v111
    %v413 = vunpack.c.h.b16 %v111
    %v414 = vunpack.c.l.b16 %v112
    %v415 = vunpack.c.h.b16 %v112
    %v416 = vunpack.c.l.b16 %v113
    %v417 = vunpack.c.h.b16 %v113
    %v418 = vunpack.c.l.b16 %v114
    %v419 = vunpack.c.h.b16 %v114
    %v420 = vunpack.c.l.b16 %v115
    %v421 = vunpack.c.h.b16 %v115
    %v422 = vunpack.c.l.b16 %v116
    %v423 = vunpack.c.h.b16 %v116
    %v424 = vunpack.c.l.b16 %v117
    %v425 = vunpack.c.h.b16 %v117
    %v426 = vunpack.c.l.b16 %v118
    %v427 = vunpack.c.h.b16 %v118
    %v428 = vunpack.c.l.b16 %v119
    %v429 = vunpack.c.h.b16 %v119
    %v430 = vunpack.c.l.b16 %v120
    %v431 = vunpack.c.h.b16 %v120
    %v432 = vunpack.c.l.b16 %v121
    %v433 = vunpack.c.h.b16 %v121
    %v434 = vunpack.c.l.b16 %v122
    %v435 = vunpack.c.h.b16 %v122
    %v436 = vunpack.c.l.b16 %v123
    %v437 = vunpack.c.h.b16 %v123
    %v438 = vunpack.c.l.b16 %v124
    %v439 = vunpack.c.h.b16 %v124
    %v440 = vunpack.c.l.b16 %v125
    %v441 = vunpack.c.h.b16 %v125
    %v442 = vunpack.c.l.b16 %v126
    %v443 = vunpack.c.h.b16 %v126
    %v444 = vunpack.c.l.b16 %v127
    %v445 = vunpack.c.h.b16 %v127
    %v446 = vunpack.c.l.b16 %v128
    %v447 = vunpack.c.h.b16 %v128
    %v448 = vunpack.c.l.b16 %v129
    %v449 = vunpack.c.h.b16 %v129
    %v450 = vunpack.c.l.b16 %v130
    %v451 = vunpack.c.h.b16 %v130
    %v452 = vunpack.c.l.b16 %v131
    %v453 = vunpack.c.h.b16 %v131
    %v454 = vunpack.c.l.b16 %v132
    %v455 = vunpack.c.h.b16 %v132
    %v456 = vunpack.c.l.b16 %v133
    %v457 = vunpack.c.h.b16 %v133
    %v458 = vunpack.c.l.b16 %v134
    %v459 = vunpack.c.h.b16 %v134
    %v460 = vunpack.c.l.b16 %v135
    %v461 = vunpack.c.h.b16 %v135
    %v462 = vunpack.c.l.b16 %v136
    %v463 = vunpack.c.h.b16 %v136
    %v464 = vunpack.c.l.b16 %v137
    %v465 = vunpack.c.h.b16 %v137
    %v466 = vunpack.c.l.b16 %v138
    %v467 = vunpack.c.h.b16 %v138
    %v468 = vunpack.c.l.b16 %v139
    %v469 = vunpack.c.h.b16 %v139
    %v470 = vpack.c.b16 %v280, %v278
    %v471 = vpack.c.b16 %v281, %v279
    %v472 = vpack.c.b16 %v284, %v282
    %v473 = vpack.c.b16 %v285, %v283
    %v474 = vpack.c.b16 %v288, %v286
    %v475 = vpack.c.b16 %v289, %v287
    %v476 = vpack.c.b16 %v292, %v290
    %v477 = vpack.c.b16 %v293, %v291
    %v478 = vpack.c.b16 %v296, %v294
    %v479 = vpack.c.b16 %v297, %v295
    %v480 = vpack.c.b16 %v300, %v298
    %v481 = vpack.c.b16 %v301, %v299
    %v482 = vpack.c.b16 %v304, %v302
    %v483 = vpack.c.b16 %v305, %v303
    %v484 = vpack.c.b16 %v308, %v306
    %v485 = vpack.c.b16 %v309, %v307
    %v486 = vpack.c.b16 %v312, %v310
    %v487 = vpack.c.b16 %v313, %v311
    %v488 = vpack.c.b16 %v316, %v314
    %v489 = vpack.c.b16 %v317, %v315
    %v490 = vpack.c.b16 %v320, %v318
    %v491 = vpack.c.b16 %v321, %v319
    %v492 = vpack.c.b16 %v324, %v322
    %v493 = vpack.c.b16 %v325, %v323
    %v494 = vpack.c.b16 %v328, %v326
    %v495 = vpack.c.b16 %v329, %v327
    %v496 = vpack.c.b16 %v332, %v330
    %v497 = vpack.c.b16 %v333, %v331
    %v498 = vpack.c.b16 %v336, %v334
    %v499 = vpack.c.b16 %v337, %v335
    %v500 = vpack.c.b16 %v340, %v338
    %v501 = vpack.c.b16 %v341, %v339
    %v502 = vpack.c.b16 %v344, %v342
    %v503 = vpack.c.b16 %v345, %v343
    %v504 = vpack.c.b16 %v348, %v346
    %v505 = vpack.c.b16 %v349, %v347
    %v506 = vpack.c.b16 %v352, %v350
    %v507 = vpack.c.b16 %v353, %v351
    %v508 = vpack.c.b16 %v356, %v354
    %v509 = vpack.c.b16 %v357, %v355
    %v510 = vpack.c.b16 %v360, %v358
    %v511 = vpack.c.b16 %v361, %v359
    %v512 = vpack.c.b16 %v364, %v362
    %v513 = vpack.c.b16 %v365, %v363
    %v514 = vpack.c.b16 %v368, %v366
    %v515 = vpack.c.b16 %v369, %v367
    %v516 = vpack.c.b16 %v372, %v370
    %v517 = vpack.c.b16 %v373, %v371
    %v518 = vpack.c.b16 %v376, %v374
    %v519 = vpack.c.b16 %v377, %v375
    %v520 = vpack.c.b16 %v380, %v378
    %v521 = vpack.c.b16 %v381, %v379
    %v522 = vpack.c.b16 %v384, %v382
    %v523 = vpack.c.b16 %v385, %v383
    %v524 = vpack.c.b16 %v388, %v386
    %v525 = vpack.c.b16 %v389, %v387
    %v526 = vpack.c.b16 %v392, %v390
    %v527 = vpack.c.b16 %v393, %v391
    %v528 = vpack.c.b16 %v396, %v394
    %v529 = vpack.c.b16 %v397, %v395
    %v530 = vpack.c.b16 %v400, %v398
    %v531 = vpack.c.b16 %v401, %v399
    %v532 = vpack.c.b16 %v404, %v402
    %v533 = vpack.c.b16 %v405, %v403
    %v534 = vpack.c.b16 %v408, %v406
    %v535 = vpack.c.b16 %v409, %v407
    %v536 = vpack.c.b16 %v412, %v410
    %v537 = vpack.c.b16 %v413, %v411
    %v538 = vpack.c.b16 %v416, %v414
    %v539 = vpack.c.b16 %v417, %v415
    %v540 = vpack.c.b16 %v420, %v418
    %v541 = vpack.c.b16 %v421, %v419
    %v542 = vpack.c.b16 %v424, %v422
    %v543 = vpack.c.b16 %v425, %v423
    %v544 = vpack.c.b16 %v428, %v426
    %v545 = vpack.c.b16 %v429, %v427
    %v546 = vpack.c.b16 %v432, %v430
    %v547 = vpack.c.b16 %v433, %v431
    %v548 = vpack.c.b16 %v436, %v434
    %v549 = vpack.c.b16 %v437, %v435
    %v550 = vpack.c.b16 %v440, %v438
    %v551 = vpack.c.b16 %v441, %v439
    %v552 = vpack.c.b16 %v444, %v442
    %v553 = vpack.c.b16 %v445, %v443
    %v554 = vpack.c.b16 %v448, %v446
    %v555 = vpack.c.b16 %v449, %v447
    %v556 = vpack.c.b16 %v452, %v450
    %v557 = vpack.c.b16 %v453, %v451
    %v558 = vpack.c.b16 %v456, %v454
    %v559 = vpack.c.b16 %v457, %v455
    %v560 = vpack.c.b16 %v460, %v458
    %v561 = vpack.c.b16 %v461, %v459
    %v562 = vpack.c.b16 %v464, %v462
    %v563 = vpack.c.b16 %v465, %v463
    %v564 = vpack.c.b16 %v468, %v466
    %v565 = vpack.c.b16 %v469, %v467
    %662 = vmatprep.subr.bf16.mxu0 %v471
    %663 = vmatpush1.bf16.msra.mxu0 %v470
    %664 = vmatprep.subr.bf16.mxu0 %v473
    %665 = vmatpush1.bf16.msra.mxu0 %v472
    %666 = vmatprep.subr.bf16.mxu0 %v475
    %667 = vmatpush1.bf16.msra.mxu0 %v474
    %668 = vmatprep.subr.bf16.mxu0 %v477
    %669 = vmatpush1.bf16.msra.mxu0 %v476
    %670 = vmatprep.subr.bf16.mxu0 %v479
    %671 = vmatpush1.bf16.msra.mxu0 %v478
    %672 = vmatprep.subr.bf16.mxu0 %v481
    %673 = vmatpush1.bf16.msra.mxu0 %v480
    %674 = vmatprep.subr.bf16.mxu0 %v483
    %675 = vmatpush1.bf16.msra.mxu0 %v482
    %676 = vmatprep.subr.bf16.mxu0 %v485
    %677 = vmatpush1.bf16.msra.mxu0 %v484
    %678 = vmatprep.subr.bf16.mxu0 %v487
    %679 = vmatpush1.bf16.msra.mxu0 %v486
    %680 = vmatprep.subr.bf16.mxu0 %v489
    %681 = vmatpush1.bf16.msra.mxu0 %v488
    %682 = vmatprep.subr.bf16.mxu0 %v491
    %683 = vmatpush1.bf16.msra.mxu0 %v490
    %684 = vmatprep.subr.bf16.mxu0 %v493
    %685 = vmatpush1.bf16.msra.mxu0 %v492
    %686 = vmatprep.subr.bf16.mxu0 %v495
    %687 = vmatpush1.bf16.msra.mxu0 %v494
    %688 = vmatprep.subr.bf16.mxu0 %v497
    %689 = vmatpush1.bf16.msra.mxu0 %v496
    %690 = vmatprep.subr.bf16.mxu0 %v499
    %691 = vmatpush1.bf16.msra.mxu0 %v498
    %692 = vmatprep.subr.bf16.mxu0 %v501
    %693 = vmatpush1.bf16.msra.mxu0 %v500
    %694 = vmatprep.mubr.bf16.mxu0 %v171
    %695 = vmatmul.mubr.bf16.gmra.mrb[0].mxu0 %v170
    %v696 = vpop.f32.mrb[0].mxu0
    %v697 = vadd.f32 %v145, %v696
    %v698 = vpop.f32.mrb[0].mxu0
    %v699 = vadd.f32 %v149, %v698
    %v700 = vpop.f32.mrb[0].mxu0
    %v701 = vadd.f32 %v145, %v700
    %v702 = vpop.f32.mrb[0].mxu0
    %v703 = vadd.f32 %v149, %v702
    %704 = vdwg.mxu0
    %705 = vmatprep.subr.bf16.mxu0 %v503
    %706 = vmatpush1.bf16.msra.mxu0 %v502
    %707 = vmatprep.subr.bf16.mxu0 %v505
    %708 = vmatpush1.bf16.msra.mxu0 %v504
    %709 = vmatprep.subr.bf16.mxu0 %v507
    %710 = vmatpush1.bf16.msra.mxu0 %v506
    %711 = vmatprep.subr.bf16.mxu0 %v509
    %712 = vmatpush1.bf16.msra.mxu0 %v508
    %713 = vmatprep.subr.bf16.mxu0 %v511
    %714 = vmatpush1.bf16.msra.mxu0 %v510
    %715 = vmatprep.subr.bf16.mxu0 %v513
    %716 = vmatpush1.bf16.msra.mxu0 %v512
    %717 = vmatprep.subr.bf16.mxu0 %v515
    %718 = vmatpush1.bf16.msra.mxu0 %v514
    %719 = vmatprep.subr.bf16.mxu0 %v517
    %720 = vmatpush1.bf16.msra.mxu0 %v516
    %721 = vmatprep.subr.bf16.mxu0 %v519
    %722 = vmatpush1.bf16.msra.mxu0 %v518
    %723 = vmatprep.subr.bf16.mxu0 %v521
    %724 = vmatpush1.bf16.msra.mxu0 %v520
    %725 = vmatprep.subr.bf16.mxu0 %v523
    %726 = vmatpush1.bf16.msra.mxu0 %v522
    %727 = vmatprep.subr.bf16.mxu0 %v525
    %728 = vmatpush1.bf16.msra.mxu0 %v524
    %729 = vmatprep.subr.bf16.mxu0 %v527
    %730 = vmatpush1.bf16.msra.mxu0 %v526
    %731 = vmatprep.subr.bf16.mxu0 %v529
    %732 = vmatpush1.bf16.msra.mxu0 %v528
    %733 = vmatprep.subr.bf16.mxu0 %v531
    %734 = vmatpush1.bf16.msra.mxu0 %v530
    %735 = vmatprep.subr.bf16.mxu0 %v533
    %736 = vmatpush1.bf16.msra.mxu0 %v532
    %737 = vmatprep.mubr.bf16.mxu0 %v173
    %738 = vmatmul.mubr.bf16.gmra.mrb[0].mxu0 %v172
    %v739 = vpop.f32.mrb[0].mxu0
    %v740 = vadd.f32 %v697, %v739
    %v741 = vpop.f32.mrb[0].mxu0
    %v742 = vadd.f32 %v699, %v741
    %v743 = vpop.f32.mrb[0].mxu0
    %v744 = vadd.f32 %v701, %v743
    %v745 = vpop.f32.mrb[0].mxu0
    %v746 = vadd.f32 %v703, %v745
    %747 = vdwg.mxu0
    %748 = vmatprep.subr.bf16.mxu0 %v535
    %749 = vmatpush1.bf16.msra.mxu0 %v534
    %750 = vmatprep.subr.bf16.mxu0 %v537
    %751 = vmatpush1.bf16.msra.mxu0 %v536
    %752 = vmatprep.subr.bf16.mxu0 %v539
    %753 = vmatpush1.bf16.msra.mxu0 %v538
    %754 = vmatprep.subr.bf16.mxu0 %v541
    %755 = vmatpush1.bf16.msra.mxu0 %v540
    %756 = vmatprep.subr.bf16.mxu0 %v543
    %757 = vmatpush1.bf16.msra.mxu0 %v542
    %758 = vmatprep.subr.bf16.mxu0 %v545
    %759 = vmatpush1.bf16.msra.mxu0 %v544
    %760 = vmatprep.subr.bf16.mxu0 %v547
    %761 = vmatpush1.bf16.msra.mxu0 %v546
    %762 = vmatprep.subr.bf16.mxu0 %v549
    %763 = vmatpush1.bf16.msra.mxu0 %v548
    %764 = vmatprep.subr.bf16.mxu0 %v551
    %765 = vmatpush1.bf16.msra.mxu0 %v550
    %766 = vmatprep.subr.bf16.mxu0 %v553
    %767 = vmatpush1.bf16.msra.mxu0 %v552
    %768 = vmatprep.subr.bf16.mxu0 %v555
    %769 = vmatpush1.bf16.msra.mxu0 %v554
    %770 = vmatprep.subr.bf16.mxu0 %v557
    %771 = vmatpush1.bf16.msra.mxu0 %v556
    %772 = vmatprep.subr.bf16.mxu0 %v559
    %773 = vmatpush1.bf16.msra.mxu0 %v558
    %774 = vmatprep.subr.bf16.mxu0 %v561
    %775 = vmatpush1.bf16.msra.mxu0 %v560
    %776 = vmatprep.subr.bf16.mxu0 %v563
    %777 = vmatpush1.bf16.msra.mxu0 %v562
    %778 = vmatprep.subr.bf16.mxu0 %v565
    %779 = vmatpush1.bf16.msra.mxu0 %v564
    %780 = vmatprep.mubr.bf16.mxu0 %v175
    %781 = vmatmul.mubr.bf16.gmra.mrb[0].mxu0 %v174
    %v782 = vpop.f32.mrb[0].mxu0
    %v783 = vadd.f32 %v740, %v782
    %v784 = vpop.f32.mrb[0].mxu0
    %v785 = vadd.f32 %v742, %v784
    %v786 = vpop.f32.mrb[0].mxu0
    %v787 = vadd.f32 %v744, %v786
    %v788 = vpop.f32.mrb[0].mxu0
    %v789 = vadd.f32 %v746, %v788
    %790 = vdwg.mxu0
    %v791 = vmax.f32 %v783, 0.0
    %v792 = vmax.f32 %v785, 0.0
    %v793 = vmax.f32 %v787, 0.0
    %v794 = vmax.f32 %v789, 0.0
    %v795 = vpack.c.bf16 %v793, %v791
    %v796 = vpack.c.bf16 %v794, %v792
    %v797 = vld [vmem:[%s3] sm:$0xf]
    %v798 = vld [vmem:[%s3 + $0x4] sm:$0xf]
    %v799 = vld [vmem:[%s3 + $0x8] sm:$0xf]
    %v800 = vld [vmem:[%s3 + $0xc] sm:$0xf]
    %v801 = vld [vmem:[%s3 + $0x10] sm:$0xf]
    %v802 = vld [vmem:[%s3 + $0x14] sm:$0xf]
    %v803 = vld [vmem:[%s3 + $0x18] sm:$0xf]
    %v804 = vld [vmem:[%s3 + $0x1c] sm:$0xf]
    %v805 = vld [vmem:[%s3 + $0x20] sm:$0xf]
    %v806 = vld [vmem:[%s3 + $0x24] sm:$0xf]
    %v807 = vld [vmem:[%s3 + $0x28] sm:$0xf]
    %v808 = vld [vmem:[%s3 + $0x2c] sm:$0xf]
    %v809 = vld [vmem:[%s3 + $0x30] sm:$0xf]
    %v810 = vld [vmem:[%s3 + $0x34] sm:$0xf]
    %v811 = vld [vmem:[%s3 + $0x38] sm:$0xf]
    %v812 = vld [vmem:[%s3 + $0x3c] sm:$0xf]
    %v813 = vld [vmem:[%s3 + $0x40] sm:$0xf]
    %v814 = vld [vmem:[%s3 + $0x44] sm:$0xf]
    %v815 = vld [vmem:[%s3 + $0x48] sm:$0xf]
    %v816 = vld [vmem:[%s3 + $0x4c] sm:$0xf]
    %v817 = vld [vmem:[%s3 + $0x50] sm:$0xf]
    %v818 = vld [vmem:[%s3 + $0x54] sm:$0xf]
    %v819 = vld [vmem:[%s3 + $0x58] sm:$0xf]
    %v820 = vld [vmem:[%s3 + $0x5c] sm:$0xf]
    %v821 = vld [vmem:[%s3 + $0x60] sm:$0xf]
    %v822 = vld [vmem:[%s3 + $0x64] sm:$0xf]
    %v823 = vld [vmem:[%s3 + $0x68] sm:$0xf]
    %v824 = vld [vmem:[%s3 + $0x6c] sm:$0xf]
    %v825 = vld [vmem:[%s3 + $0x70] sm:$0xf]
    %v826 = vld [vmem:[%s3 + $0x74] sm:$0xf]
    %v827 = vld [vmem:[%s3 + $0x78] sm:$0xf]
    %v828 = vld [vmem:[%s3 + $0x7c] sm:$0xf]
    %v829 = vld [vmem:[%s4] sm:$0x1]
    %v831 = vlaneseq
    %v832 = vshrl.u32 %v831, 7
    %v833 = vsub.s32 0, %v832
    %v834 = vrot.slane %v829, %v833
    %v868 = vunpack.c.l.b16 %v797
    %v869 = vunpack.c.l.b16 %v798
    %v870 = vunpack.c.l.b16 %v799
    %v871 = vunpack.c.l.b16 %v800
    %v872 = vunpack.c.l.b16 %v801
    %v873 = vunpack.c.l.b16 %v802
    %v874 = vunpack.c.l.b16 %v803
    %v875 = vunpack.c.l.b16 %v804
    %v876 = vunpack.c.l.b16 %v805
    %v877 = vunpack.c.l.b16 %v806
    %v878 = vunpack.c.l.b16 %v807
    %v879 = vunpack.c.l.b16 %v808
    %v880 = vunpack.c.l.b16 %v809
    %v881 = vunpack.c.l.b16 %v810
    %v882 = vunpack.c.l.b16 %v811
    %v883 = vunpack.c.l.b16 %v812
    %v884 = vunpack.c.l.b16 %v813
    %v885 = vunpack.c.l.b16 %v814
    %v886 = vunpack.c.l.b16 %v815
    %v887 = vunpack.c.l.b16 %v816
    %v888 = vunpack.c.l.b16 %v817
    %v889 = vunpack.c.l.b16 %v818
    %v890 = vunpack.c.l.b16 %v819
    %v891 = vunpack.c.l.b16 %v820
    %v892 = vunpack.c.l.b16 %v821
    %v893 = vunpack.c.l.b16 %v822
    %v894 = vunpack.c.l.b16 %v823
    %v895 = vunpack.c.l.b16 %v824
    %v896 = vunpack.c.l.b16 %v825
    %v897 = vunpack.c.l.b16 %v826
    %v898 = vunpack.c.l.b16 %v827
    %v899 = vunpack.c.l.b16 %v828
    %v900 = vpack.c.b16 %v869, %v868
    %v901 = vpack.c.b16 %v871, %v870
    %v902 = vpack.c.b16 %v873, %v872
    %v903 = vpack.c.b16 %v875, %v874
    %v904 = vpack.c.b16 %v877, %v876
    %v905 = vpack.c.b16 %v879, %v878
    %v906 = vpack.c.b16 %v881, %v880
    %v907 = vpack.c.b16 %v883, %v882
    %v908 = vpack.c.b16 %v885, %v884
    %v909 = vpack.c.b16 %v887, %v886
    %v910 = vpack.c.b16 %v889, %v888
    %v911 = vpack.c.b16 %v891, %v890
    %v912 = vpack.c.b16 %v893, %v892
    %v913 = vpack.c.b16 %v895, %v894
    %v914 = vpack.c.b16 %v897, %v896
    %v915 = vpack.c.b16 %v899, %v898
    %932 = vmatprep.subr.bf16.mxu0 0
    %933 = vmatpush1.bf16.msra.mxu0 %v900
    %934 = vmatprep.subr.bf16.mxu0 0
    %935 = vmatpush1.bf16.msra.mxu0 %v901
    %936 = vmatprep.subr.bf16.mxu0 0
    %937 = vmatpush1.bf16.msra.mxu0 %v902
    %938 = vmatprep.subr.bf16.mxu0 0
    %939 = vmatpush1.bf16.msra.mxu0 %v903
    %940 = vmatprep.subr.bf16.mxu0 0
    %941 = vmatpush1.bf16.msra.mxu0 %v904
    %942 = vmatprep.subr.bf16.mxu0 0
    %943 = vmatpush1.bf16.msra.mxu0 %v905
    %944 = vmatprep.subr.bf16.mxu0 0
    %945 = vmatpush1.bf16.msra.mxu0 %v906
    %946 = vmatprep.subr.bf16.mxu0 0
    %947 = vmatpush1.bf16.msra.mxu0 %v907
    %948 = vmatprep.subr.bf16.mxu0 0
    %949 = vmatpush1.bf16.msra.mxu0 %v908
    %950 = vmatprep.subr.bf16.mxu0 0
    %951 = vmatpush1.bf16.msra.mxu0 %v909
    %952 = vmatprep.subr.bf16.mxu0 0
    %953 = vmatpush1.bf16.msra.mxu0 %v910
    %954 = vmatprep.subr.bf16.mxu0 0
    %955 = vmatpush1.bf16.msra.mxu0 %v911
    %956 = vmatprep.subr.bf16.mxu0 0
    %957 = vmatpush1.bf16.msra.mxu0 %v912
    %958 = vmatprep.subr.bf16.mxu0 0
    %959 = vmatpush1.bf16.msra.mxu0 %v913
    %960 = vmatprep.subr.bf16.mxu0 0
    %961 = vmatpush1.bf16.msra.mxu0 %v914
    %962 = vmatprep.subr.bf16.mxu0 0
    %963 = vmatpush1.bf16.msra.mxu0 %v915
    %964 = vmatprep.mubr.bf16.mxu0 %v796
    %965 = vmatmul.mubr.bf16.gmra.mrb[0].mxu0 %v795
    %v966 = vpop.f32.mrb[0].mxu0
    %v967 = vadd.f32 %v834, %v966
    %v968 = vpop.f32.mrb[0].mxu0
    %v969 = vpop.f32.mrb[0].mxu0
    %v970 = vadd.f32 %v834, %v969
    %v971 = vpop.f32.mrb[0].mxu0
    %972 = vdwg.mxu0
    %v973 = vld [vmem:[%s5] sm:$0x1]
    %v974 = vmul.f32 %v967, %v967
    %v975 = vmul.f32 %v970, %v970
    %v977 = vlaneseq
    %v978 = vshrl.u32 %v977, 7
    %v979 = vsub.s32 0, %v978
    %v980 = vrot.slane %v973, %v979
    %v982 = vmul.f32 %v974, %v980
    %v983 = vmul.f32 %v975, %v980
    %984 = vadd.xlane.f32.xlu0 %v982
    %v985 = vpop.xlane.xlu0 %984
    %986 = vadd.xlane.f32.xlu0 %v983
    %v987 = vpop.xlane.xlu0 %986
    %v988 = vrsqrt.pop %v985
    %v989 = vmul.f32 %v985, %v988
    %vm990 = vcmp.eq.f32.partialorder %v985, inf
    %v991 = vsel %vm990, %v985, %v989
    %vm992 = vcmp.eq.f32.partialorder %v985, 0.0
    %v993 = vand.u32 %v985, 2147483648
    %v994 = vsel %vm992, %v993, %v991
    %v995 = vrsqrt.pop %v987
    %v996 = vmul.f32 %v987, %v995
    %vm997 = vcmp.eq.f32.partialorder %v987, inf
    %v998 = vsel %vm997, %v987, %v996
    %vm999 = vcmp.eq.f32.partialorder %v987, 0.0
    %v1000 = vand.u32 %v987, 2147483648
    %v1001 = vsel %vm999, %v1000, %v998
    %v1002 = vadd.f32 %v994, 1e-12
    %v1003 = vadd.f32 %v1001, 1e-12
    %v1004 = vrcp.pop %v1002
    %v1005 = vmul.f32 1.0, %v1004
    %v1006 = vrcp.pop %v1003
    %v1007 = vmul.f32 1.0, %v1006
    %v1008 = vsub.f32 %v1005, 1.0
    %v1009 = vsub.f32 %v1007, 1.0
    %v1010 = vmul.f32 %v980, %v1008
    %v1011 = vmul.f32 %v980, %v1009
    %v1012 = vadd.f32 %v1010, 1.0
    %v1013 = vadd.f32 %v1011, 1.0
    %v1014 = vmul.f32 %v967, %v1012
    %v1015 = vmul.f32 %v970, %v1013
    %1016 = vst [vmem:[%s6] sm:$0xff] %v1014
    %1017 = vst [vmem:[%s6 + $0x8] sm:$0xff] %v1015
    // Predicated region
    $region30: #{pose_decoder_forward_packed.1} parent=1 // pred_check
      _
    $region31: #{pose_decoder_forward_packed.1} parent=1 // pred_check_branch
      %1019 = sbr.rel (0) target = $region33
    $region32: #{pose_decoder_forward_packed.1} parent=1 // pred_region
      _
    $region33: #{pose_decoder_forward_packed.1} parent=1 // pred_fallthru
      _
    // Predicated region
    $region34: #{pose_decoder_forward_packed.1} parent=1 // pred_check
      _
    $region35: #{pose_decoder_forward_packed.1} parent=1 // pred_check_branch
      %1021 = sbr.rel (0) target = $region37
    $region36: #{pose_decoder_forward_packed.1} parent=1 // pred_region
      _
    $region37: #{pose_decoder_forward_packed.1} parent=1 // pred_fallthru
      _
    %1022 = vsyncpa [#allocation3], 1

</llo_original>
